<compile_context>
chip_gen: v6e
topology: v6e:2x2x1
jax: 0.10.0
libtpu: 0.0.40
codegen_flags: <defaults>
</compile_context>

<pallas_src>
import jax
import jax.numpy as jnp
from jax.experimental import pallas as pl
from jax.experimental.pallas import tpu as pltpu


def _embeddings_kernel(ids_ref,        # SMEM  [B, S] int32 (scalar prefetch)
                       tok_hbm,        # HBM   [V, H] token table (pl.ANY)
                       pos_ref,        # VMEM  (tS, H) contiguous position rows
                       segid_ref,      # VMEM  (tS, 1) int32 segment ids
                       seg_tab_ref,    # VMEM  (G, H) full segment table
                       out_ref,        # VMEM  (tS, H) output tile
                       tok_buf,        # VMEM scratch (tS, H) gathered token rows
                       copy_sem):      # DMA semaphore (1,)
    b = pl.program_id(0)
    st = pl.program_id(1)
    tS, H = out_ref.shape
    V = tok_hbm.shape[0]
    base = st * tS

    # ---- gather tS token-embedding rows from HBM ------------------------
    # Issue every row copy before waiting on any of them so the latency of the
    # random-row HBM reads overlaps (many outstanding descriptors).
    @pl.loop(0, tS)
    def _start(i):
        row = ids_ref[b, base + i]
        row = jnp.clip(row, 0, V - 1)          # guard against OOB ids
        pltpu.make_async_copy(tok_hbm.at[pl.ds(row, 1)],
                              tok_buf.at[pl.ds(i, 1)],
                              copy_sem.at[0]).start()

    @pl.loop(0, tS)
    def _wait(i):
        # All row copies share one semaphore and have identical byte counts,
        # so each wait retires exactly one completion.
        pltpu.make_async_copy(tok_hbm.at[pl.ds(0, 1)],
                              tok_buf.at[pl.ds(0, 1)],
                              copy_sem.at[0]).wait()

    # ---- sum token + position embeddings (f32 accumulate) ---------------
    acc = tok_buf[...].astype(jnp.float32) + pos_ref[...].astype(jnp.float32)

    # ---- segment embedding: tiny table, VMEM resident, VPU select -------
    seg_ids = segid_ref[...]                   # (tS, 1) int32
    G = seg_tab_ref.shape[0]
    for g in range(G):                         # static, G is tiny (== 2)
        row = seg_tab_ref[pl.ds(g, 1), :].astype(jnp.float32)       # (1, H)
        mask = jnp.broadcast_to(seg_ids == g, (tS, H))
        acc = acc + jnp.where(mask, jnp.broadcast_to(row, (tS, H)), 0.0)

    out_ref[...] = acc.astype(out_ref.dtype)


def _choose_token_tile(S):
    """Largest tile in {512,...,8} that divides S; fall back to S itself."""
    for cand in (512, 256, 128, 64, 32, 16, 8):
        if S % cand == 0:
            return cand
    return S


def bert_embeddings(input_ids, segment_ids,
                    token_table, position_table, segment_table):
    """input_ids, segment_ids: [B, S] int. Tables: [V,H], [P,H], [G,H].

    Returns [B, S, H] float32 = tok_emb[ids] + pos_emb[arange(S)] + seg_emb[seg_ids].
    """
    B, S = input_ids.shape
    V, H = token_table.shape
    P = position_table.shape[0]
    G = segment_table.shape[0]
    assert S <= P, "sequence length exceeds max_positions"

    tS = _choose_token_tile(S)
    n_tiles = S // tS

    input_ids = input_ids.astype(jnp.int32)
    segment_ids_r = jnp.clip(segment_ids.astype(jnp.int32), 0, G - 1)
    segment_ids_r = segment_ids_r.reshape(B, S, 1)

    grid_spec = pltpu.PrefetchScalarGridSpec(
        num_scalar_prefetch=1,                 # input_ids -> SMEM
        grid=(B, n_tiles),
        in_specs=[
            # token table stays in HBM; rows gathered manually in the kernel
            pl.BlockSpec(memory_space=pl.ANY),
            # position rows are arange(S): contiguous (tS, H) streaming blocks
            pl.BlockSpec((tS, H), lambda b, st, ids: (st, 0)),
            # this tile's segment ids (batch dim squeezed)
            pl.BlockSpec((None, tS, 1), lambda b, st, ids: (b, st, 0)),
            # full segment table resident in VMEM (G rows is tiny)
            pl.BlockSpec((G, H), lambda b, st, ids: (0, 0)),
        ],
        out_specs=pl.BlockSpec((None, tS, H), lambda b, st, ids: (b, st, 0)),
        scratch_shapes=[
            pltpu.VMEM((tS, H), token_table.dtype),   # gathered token rows
            pltpu.SemaphoreType.DMA((1,)),
        ],
    )

    return pl.pallas_call(
        _embeddings_kernel,
        out_shape=jax.ShapeDtypeStruct((B, S, H), jnp.float32),
        grid_spec=grid_spec,
        compiler_params=pltpu.CompilerParams(
            dimension_semantics=("parallel", "parallel")),
    )(input_ids, token_table, position_table, segment_ids_r, segment_table)


def reference_embeddings(input_ids, segment_ids,
                         token_table, position_table, segment_table):
    B, S = input_ids.shape
    pos_ids = jnp.broadcast_to(jnp.arange(S)[None, :], (B, S))
    return (token_table[input_ids].astype(jnp.float32)
            + position_table[pos_ids].astype(jnp.float32)
            + segment_table[segment_ids].astype(jnp.float32))


if __name__ == "__main__":
    # Small config consistent with the module's __init__.
    vocab_size = 100
    max_positions = 64
    segment_size = 2
    hidden_size = 128
    padding_token_idx = 0
    B, S = 2, 8

    key = jax.random.PRNGKey(0)
    k_tok, k_pos, k_seg, k_ids, k_segids = jax.random.split(key, 5)

    token_table = jax.random.normal(k_tok, (vocab_size, hidden_size), jnp.float32) * 0.02
    # nn.Embedding(padding_idx=...) zero-initializes the padding row.
    token_table = token_table.at[padding_token_idx].set(0.0)
    position_table = jax.random.normal(k_pos, (max_positions, hidden_size), jnp.float32) * 0.02
    segment_table = jax.random.normal(k_seg, (segment_size, hidden_size), jnp.float32) * 0.02

    input_ids = jax.random.randint(k_ids, (B, S), 0, vocab_size, jnp.int32)
    # make sure a padding token appears
    input_ids = input_ids.at[0, 0].set(padding_token_idx)
    segment_ids = jax.random.randint(k_segids, (B, S), 0, segment_size, jnp.int32)

    out = bert_embeddings(input_ids, segment_ids,
                          token_table, position_table, segment_table)
    out = jax.block_until_ready(out)

    ref = reference_embeddings(input_ids, segment_ids,
                               token_table, position_table, segment_table)
    assert out.shape == (B, S, hidden_size)
    assert jnp.allclose(out, ref, atol=1e-6), "mismatch vs reference"

    print("KERNEL_OK")
</pallas_src>

<mosaic_0001>
module attributes {stable_mosaic.version = 11 : i64} {
  func.func @_embeddings_kernel(%arg0: i32, %arg1: i32, %arg2: memref<2x8xi32, #tpu.memory_space<smem>>, %arg3: memref<100x128xf32, #tpu.memory_space<any>>, %arg4: memref<8x128xf32, #tpu.memory_space<vmem>>, %arg5: memref<1x8x1xi32, #tpu.memory_space<vmem>>, %arg6: memref<2x128xf32, #tpu.memory_space<vmem>>, %arg7: memref<1x8x128xf32, #tpu.memory_space<vmem>>, %arg8: memref<8x128xf32, #tpu.memory_space<vmem>>, %arg9: memref<1x!tpu.dma_semaphore, #tpu.memory_space<semaphore_mem>>) attributes {dimension_semantics = [#tpu.dimension_semantics<parallel>, #tpu.dimension_semantics<parallel>], iteration_bounds = array<i64: 2, 1>, scalar_prefetch = 1 : i64, scratch_operands = 2 : i64, tpu.core_type = #tpu.core_type<tc>, window_params = [{}, {transform_indices = @transform_1, window_bounds = array<i64: 8, 128>}, {transform_indices = @transform_2, window_bounds = array<i64: 1, 8, 1>}, {pipeline_mode = #tpu.pipeline_mode<synchronous>, transform_indices = @transform_3, window_bounds = array<i64: 2, 128>}, {transform_indices = @transform_4, window_bounds = array<i64: 1, 8, 128>}]} {
    %c8_i32 = arith.constant 8 : i32
    %0 = arith.muli %arg1, %c8_i32 : i32
    %c0_i32 = arith.constant 0 : i32
    %c8_i32_0 = arith.constant 8 : i32
    %1 = arith.addi %c0_i32, %c8_i32_0 : i32
    %c1_i32 = arith.constant 1 : i32
    scf.for %arg10 = %c0_i32 to %1 step %c1_i32  : i32 {
      %c1_i32_20 = arith.constant 1 : i32
      %31 = arith.muli %arg10, %c1_i32_20 : i32
      %c0_i32_21 = arith.constant 0 : i32
      %32 = arith.addi %c0_i32_21, %31 : i32
      %33 = arith.addi %0, %32 : i32
      %34 = arith.index_cast %arg0 : i32 to index
      %35 = arith.index_cast %33 : i32 to index
      %36 = memref.load %arg2[%34, %35] : memref<2x8xi32, #tpu.memory_space<smem>>
      %c0_i32_22 = arith.constant 0 : i32
      %c99_i32 = arith.constant 99 : i32
      %37 = arith.maxsi %c0_i32_22, %36 : i32
      %38 = arith.minsi %c99_i32, %37 : i32
      %c0_i32_23 = arith.constant 0 : i32
      %c0_i32_24 = arith.constant 0 : i32
      %39 = tpu.memref_slice %arg3[%38, %c0_i32_24] : memref<100x128xf32, #tpu.memory_space<any>> -> memref<1x128xf32, #tpu.memory_space<any>>
      %c0_i32_25 = arith.constant 0 : i32
      %40 = tpu.memref_slice %arg8[%32, %c0_i32_25] : memref<8x128xf32, #tpu.memory_space<vmem>> -> memref<1x128xf32, #tpu.memory_space<vmem>>
      %41 = tpu.memref_slice %arg9[%c0_i32_23] : memref<1x!tpu.dma_semaphore, #tpu.memory_space<semaphore_mem>> -> memref<1x!tpu.dma_semaphore, #tpu.memory_space<semaphore_mem>>
      %42 = tpu.memref_squeeze %41 : memref<1x!tpu.dma_semaphore, #tpu.memory_space<semaphore_mem>> -> memref<!tpu.dma_semaphore, #tpu.memory_space<semaphore_mem>>
      tpu.enqueue_dma source(%39 : memref<1x128xf32, #tpu.memory_space<any>>) target(%40 : memref<1x128xf32, #tpu.memory_space<vmem>>) target_semaphore(%42 : memref<!tpu.dma_semaphore, #tpu.memory_space<semaphore_mem>>)
    }
    %c8_i32_1 = arith.constant 8 : i32
    %c0_i32_2 = arith.constant 0 : i32
    %c8_i32_3 = arith.constant 8 : i32
    %2 = arith.addi %c0_i32_2, %c8_i32_3 : i32
    %c1_i32_4 = arith.constant 1 : i32
    scf.for %arg10 = %c0_i32_2 to %2 step %c1_i32_4  : i32 {
      %c0_i32_20 = arith.constant 0 : i32
      %c0_i32_21 = arith.constant 0 : i32
      %c0_i32_22 = arith.constant 0 : i32
      %31 = tpu.memref_slice %arg3[%c0_i32_21, %c0_i32_22] : memref<100x128xf32, #tpu.memory_space<any>> -> memref<1x128xf32, #tpu.memory_space<any>>
      %c0_i32_23 = arith.constant 0 : i32
      %c0_i32_24 = arith.constant 0 : i32
      %32 = tpu.memref_slice %arg8[%c0_i32_23, %c0_i32_24] : memref<8x128xf32, #tpu.memory_space<vmem>> -> memref<1x128xf32, #tpu.memory_space<vmem>>
      %33 = tpu.memref_slice %arg9[%c0_i32_20] : memref<1x!tpu.dma_semaphore, #tpu.memory_space<semaphore_mem>> -> memref<1x!tpu.dma_semaphore, #tpu.memory_space<semaphore_mem>>
      %34 = tpu.memref_squeeze %33 : memref<1x!tpu.dma_semaphore, #tpu.memory_space<semaphore_mem>> -> memref<!tpu.dma_semaphore, #tpu.memory_space<semaphore_mem>>
      tpu.wait_dma2 semaphore(%34 : memref<!tpu.dma_semaphore, #tpu.memory_space<semaphore_mem>>) src(%31 : memref<1x128xf32, #tpu.memory_space<any>>) dst(%32 : memref<1x128xf32, #tpu.memory_space<vmem>>)
    }
    %c0 = arith.constant 0 : index
    %c0_5 = arith.constant 0 : index
    %3 = vector.load %arg8[%c0, %c0_5] : memref<8x128xf32, #tpu.memory_space<vmem>>, vector<8x128xf32>
    %c0_6 = arith.constant 0 : index
    %c0_7 = arith.constant 0 : index
    %4 = vector.load %arg4[%c0_6, %c0_7] : memref<8x128xf32, #tpu.memory_space<vmem>>, vector<8x128xf32>
    %5 = arith.addf %3, %4 : vector<8x128xf32>
    %c0_8 = arith.constant 0 : index
    %c0_9 = arith.constant 0 : index
    %c0_10 = arith.constant 0 : index
    %6 = vector.load %arg5[%c0_8, %c0_9, %c0_10] : memref<1x8x1xi32, #tpu.memory_space<vmem>>, vector<1x8x1xi32>
    %7 = vector.shape_cast %6 : vector<1x8x1xi32> to vector<8x1xi32>
    %c0_11 = arith.constant 0 : index
    %c0_12 = arith.constant 0 : index
    %8 = vector.load %arg6[%c0_11, %c0_12] : memref<2x128xf32, #tpu.memory_space<vmem>>, vector<1x128xf32>
    %c0_i32_13 = arith.constant 0 : i32
    %9 = vector.broadcast %c0_i32_13 : i32 to vector<8x1xi32>
    %10 = arith.cmpi eq, %7, %9 : vector<8x1xi32>
    %11 = vector.shape_cast %10 : vector<8x1xi1> to vector<8x1xi1>
    %12 = vector.broadcast %11 : vector<8x1xi1> to vector<8x128xi1>
    %13 = vector.shape_cast %8 : vector<1x128xf32> to vector<1x128xf32>
    %14 = vector.broadcast %13 : vector<1x128xf32> to vector<8x128xf32>
    %cst = arith.constant 0.000000e+00 : f32
    %15 = vector.broadcast %cst : f32 to vector<8x128xf32>
    %16 = arith.select %12, %14, %15 : vector<8x128xi1>, vector<8x128xf32>
    %17 = arith.addf %5, %16 : vector<8x128xf32>
    %c1 = arith.constant 1 : index
    %c0_14 = arith.constant 0 : index
    %18 = vector.load %arg6[%c1, %c0_14] : memref<2x128xf32, #tpu.memory_space<vmem>>, vector<1x128xf32>
    %c1_i32_15 = arith.constant 1 : i32
    %19 = vector.broadcast %c1_i32_15 : i32 to vector<8x1xi32>
    %20 = arith.cmpi eq, %7, %19 : vector<8x1xi32>
    %21 = vector.shape_cast %20 : vector<8x1xi1> to vector<8x1xi1>
    %22 = vector.broadcast %21 : vector<8x1xi1> to vector<8x128xi1>
    %23 = vector.shape_cast %18 : vector<1x128xf32> to vector<1x128xf32>
    %24 = vector.broadcast %23 : vector<1x128xf32> to vector<8x128xf32>
    %cst_16 = arith.constant 0.000000e+00 : f32
    %25 = vector.broadcast %cst_16 : f32 to vector<8x128xf32>
    %26 = arith.select %22, %24, %25 : vector<8x128xi1>, vector<8x128xf32>
    %27 = arith.addf %17, %26 : vector<8x128xf32>
    %c0_17 = arith.constant 0 : index
    %c0_18 = arith.constant 0 : index
    %c0_19 = arith.constant 0 : index
    %28 = vector.load %arg7[%c0_17, %c0_18, %c0_19] : memref<1x8x128xf32, #tpu.memory_space<vmem>>, vector<1x8x128xf32>
    %29 = vector.shape_cast %28 : vector<1x8x128xf32> to vector<8x128xf32>
    %30 = vector.shape_cast %27 : vector<8x128xf32> to vector<1x8x128xf32>
    tpu.vector_store %arg7[%c0_17, %c0_18, %c0_19], %30 {strides = array<i32>} : memref<1x8x128xf32, #tpu.memory_space<vmem>>, vector<1x8x128xf32>,
    return
  }
  func.func @transform_1(%arg0: i32, %arg1: i32, %arg2: memref<2x8xi32, #tpu.memory_space<smem>>) -> (i32, i32) {
    %c0_i32 = arith.constant 0 : i32
    %c0_i32_0 = arith.constant 0 : i32
    return %arg1, %c0_i32 : i32, i32
  }
  func.func @transform_2(%arg0: i32, %arg1: i32, %arg2: memref<2x8xi32, #tpu.memory_space<smem>>) -> (i32, i32, i32) {
    %c0_i32 = arith.constant 0 : i32
    %c0_i32_0 = arith.constant 0 : i32
    return %arg0, %arg1, %c0_i32 : i32, i32, i32
  }
  func.func @transform_3(%arg0: i32, %arg1: i32, %arg2: memref<2x8xi32, #tpu.memory_space<smem>>) -> (i32, i32) {
    %c0_i32 = arith.constant 0 : i32
    %c0_i32_0 = arith.constant 0 : i32
    %c0_i32_1 = arith.constant 0 : i32
    return %c0_i32, %c0_i32_0 : i32, i32
  }
  func.func @transform_4(%arg0: i32, %arg1: i32, %arg2: memref<2x8xi32, #tpu.memory_space<smem>>) -> (i32, i32, i32) {
    %c0_i32 = arith.constant 0 : i32
    %c0_i32_0 = arith.constant 0 : i32
    return %arg0, %arg1, %c0_i32 : i32, i32, i32
  }
}

</mosaic_0001>

<llo_original>
// kernel: tpu_custom_call.1
$region0: #{tpu_custom_call.1}
  #allocation0 [shape = 'u32[]', space=smem, size = 0x4, offset = 0x4, fixed_abs, tag = 'smem constant byte address 0x4 - core index']
  #allocation1 [shape = 'u32[144,128]{1,0:T(1,128)}', space=vmem, size = 0x12000, scoped, tag = 'internal scratch']
  #allocation2 [shape = 'f32[8,128]{1,0:T(8,128)}', space=vmem, size = 0x1000, scoped, tag = 'scratch operand']
  #allocation3 [shape = 's32[1]{0}', space=sflag, size = 0x4, scoped, tag = 'scratch operand']
  #allocation4 [shape = 's32[1]{0}', space=sflag, size = 0x4, scoped, tag = 'scoped memory for tpu_custom_call.1']
  #allocation5 [shape = 'u8[1024]{0}', space=smem, size = 0x400, scoped, tag = 'prefetched SMEM operand 0']
  #allocation10 [shape = 's32[]', space=sflag, size = 0x4, offset = 0, fixed_abs, tag = 'sflag constant byte address 0x0 - dummy sync flag']
  #allocation11 [shape = 's32[]', space=sflag, size = 0x4, offset = 0, fixed_abs, tag = 'sflag constant byte address 0x0 - dummy sync flag']
  #allocation12 [shape = 'u32[]', space=smem, size = 0x4, offset = 0x44, fixed_abs, tag = 'smem constant byte address 0x44 - assertion arg 0']
  #allocation13 [shape = 'u32[]', space=smem, size = 0x4, offset = 0x48, fixed_abs, tag = 'smem constant byte address 0x48 - assertion arg 1']
  %s0 = inlined_call_operand.vmem [shape: s32[2,8], index: 0, kind: input, shape index: {}]
  %s1 = inlined_call_operand.hbm [shape: f32[100,128], index: 1, kind: input, shape index: {}]
  %s2 = inlined_call_operand.hbm [shape: f32[64,128], index: 2, kind: input, shape index: {}]
  %s3 = inlined_call_operand.vmem [shape: s32[2,8,1], index: 3, kind: input, shape index: {}]
  %s4 = inlined_call_operand.vmem [shape: f32[2,128], index: 4, kind: input, shape index: {}]
  %s5 = inlined_call_operand.hbm [shape: f32[2,8,128], index: 5, kind: output, shape index: {}]
  %s6 = sld [smem:[#allocation0]]
  $region67: #{tpu_custom_call.1} parent=0
    _
  %s8 = ssub.s32 1, %s6
  %s9 = scalar_select 0, %s8, %s6
  %s10 = sshll.u32 %s0, 4
  %s11 = int_to_ptr.vmem [resolvable:$true] %s10
  %13 = dma.vmem_to_smem %s11, 32, [#allocation5], [#allocation4]
  %14 = dma.done [#allocation4], 32
  %15 = sfence
  $region1: #{tpu_custom_call.1} parent=0
    #allocation6 [shape = 'u8[4096]{0}', space=vmem, size = 0x1000, scoped, tag = 'input window, operand 2, single buffered']
    #allocation7 [shape = 's32[2]{0}', space=sflag, size = 0x8, scoped, tag = 'scoped memory for tpu_custom_call.1']
    #allocation8 [shape = 's32[2]{0}', space=sflag, size = 0x8, scoped, tag = 'scoped memory for tpu_custom_call.1']
    #allocation9 [shape = 'u8[8192]{0}', space=vmem, size = 0x2000, scoped, tag = 'output window, operand 0']
    %16 = vsyncpa [#allocation7], 0
    %17 = vsyncpa [#allocation8], 0
    %s18 = scalar_lea.sflag [#allocation8], 1
    %19 = vsyncpa %s18, 0
    loop: start=0, step=1, limit=4
    $region2: #{tpu_custom_call.1} parent=1 // loop_pre_header
      _
    $region3: #{tpu_custom_call.1} parent=1 // loop_header
      %s21 = sphi 0, %s25
      %p22 = scmp.ge.s32.totalorder %s21, 4
      %s28 = sphi 0, %s40
      %s29 = sphi 0, %s36
      %s30 = sphi 0, %s28
      %s31 = sphi 0, %s29
      %s32 = sphi 0, %s30
      %s33 = sphi 0, %s31
      %s43 = sphi 0, %s45
      %s46 = sphi 0, %s43
      %s47 = sphi 0, %s46
      %s63 = sphi 0, %s47
      %s71 = sphi 0, %s73
      %s74 = sphi 0, %s71
      %s75 = sphi 0, %s74
      %s91 = sphi 0, %s75
      %s95 = sphi 0, %s95
      %s97 = sphi 0, %s95
      %s98 = sphi 0, %s97
      %s112 = sphi 0, %s98
      %s120 = sphi 0, %s122
      %s123 = sphi 0, %s120
      %s124 = sphi 0, %s123
      %s140 = sphi 0, %s124
    $region4: #{tpu_custom_call.1} parent=1 // loop_header_branch
      %24 = sbr.rel (%p22) target = $region8
    $region5: #{tpu_custom_call.1} parent=1 // loop_body
      %s26 = ssub.s32 %s21, 1
      %s27 = ssub.s32 %s21, 2
      %s34 = sadd.s32 1, %s29
      %p35 = scmp.ge.s32.totalorder %s34, 1
      %s36 = scalar_select %p35, 0, %s34
      %s37 = sadd.s32 1, %s28
      %s38 = scalar_select %p35, %s37, %s28
      %p39 = scmp.ge.s32.totalorder %s38, 2
      %s40 = scalar_select %p39, 0, %s38
      %s41 = ssub.s32 %s29, %s36
      %p42 = scmp.eq.s32.totalorder %s41, 0
      %s44 = sadd.s32 %s43, 1
      %s45 = scalar_select %p42, %s43, %s44
      %p48 = pneg %p42
      %p49 = scmp.eq.s32.totalorder %s21, 1
      %p50 = por %p48, %p49
      %p51 = scmp.ne.s32.totalorder %s43, %s46
      %p52 = scmp.eq.s32.totalorder %s21, 0
      %p53 = por %p51, %p52
      %p54 = scmp.ne.s32.totalorder %s43, %s46
      %p55 = scmp.eq.s32.totalorder %s26, 1
      %p56 = por %p54, %p55
      %p57 = scmp.ne.s32.totalorder %s46, %s47
      %p58 = scmp.eq.s32.totalorder %s26, 0
      %p59 = por %p57, %p58
      %p60 = scmp.ne.s32.totalorder %s46, %s47
      %p61 = scmp.eq.s32.totalorder %s27, 1
      %p62 = por %p60, %p61
      %p64 = scmp.ne.s32.totalorder %s47, %s63
      %p65 = scmp.eq.s32.totalorder %s27, 0
      %p66 = por %p64, %p65
      %s67 = ssub.s32 %s28, %s40
      %s68 = ssub.s32 %s29, %s36
      %s69 = sor.u32 %s67, %s68
      %p70 = scmp.eq.s32.totalorder %s69, 0
      %s72 = sadd.s32 %s71, 1
      %s73 = scalar_select %p70, %s71, %s72
      %p76 = pneg %p70
      %p77 = scmp.eq.s32.totalorder %s21, 1
      %p78 = por %p76, %p77
      %p79 = scmp.ne.s32.totalorder %s71, %s74
      %p80 = scmp.eq.s32.totalorder %s21, 0
      %p81 = por %p79, %p80
      %p82 = scmp.ne.s32.totalorder %s71, %s74
      %p83 = scmp.eq.s32.totalorder %s26, 1
      %p84 = por %p82, %p83
      %p85 = scmp.ne.s32.totalorder %s74, %s75
      %p86 = scmp.eq.s32.totalorder %s26, 0
      %p87 = por %p85, %p86
      %p88 = scmp.ne.s32.totalorder %s74, %s75
      %p89 = scmp.eq.s32.totalorder %s27, 1
      %p90 = por %p88, %p89
      %p92 = scmp.ne.s32.totalorder %s75, %s91
      %p93 = scmp.eq.s32.totalorder %s27, 0
      %p94 = por %p92, %p93
      %s96 = sadd.s32 %s95, 1
      %p99 = scmp.eq.s32.totalorder %s21, 1
      %p100 = scmp.ne.s32.totalorder %s95, %s97
      %p101 = scmp.eq.s32.totalorder %s21, 0
      %p102 = por %p100, %p101
      %p103 = scmp.ne.s32.totalorder %s95, %s97
      %p104 = scmp.eq.s32.totalorder %s26, 1
      %p105 = por %p103, %p104
      %p106 = scmp.ne.s32.totalorder %s97, %s98
      %p107 = scmp.eq.s32.totalorder %s26, 0
      %p108 = por %p106, %p107
      %p109 = scmp.ne.s32.totalorder %s97, %s98
      %p110 = scmp.eq.s32.totalorder %s27, 1
      %p111 = por %p109, %p110
      %p113 = scmp.ne.s32.totalorder %s98, %s112
      %p114 = scmp.eq.s32.totalorder %s27, 0
      %p115 = por %p113, %p114
      %s116 = ssub.s32 %s28, %s40
      %s117 = ssub.s32 %s29, %s36
      %s118 = sor.u32 %s116, %s117
      %p119 = scmp.eq.s32.totalorder %s118, 0
      %s121 = sadd.s32 %s120, 1
      %s122 = scalar_select %p119, %s120, %s121
      %p125 = pneg %p119
      %p126 = scmp.eq.s32.totalorder %s21, 1
      %p127 = por %p125, %p126
      %p128 = scmp.ne.s32.totalorder %s120, %s123
      %p129 = scmp.eq.s32.totalorder %s21, 0
      %p130 = por %p128, %p129
      %p131 = scmp.ne.s32.totalorder %s120, %s123
      %p132 = scmp.eq.s32.totalorder %s26, 1
      %p133 = por %p131, %p132
      %p134 = scmp.ne.s32.totalorder %s123, %s124
      %p135 = scmp.eq.s32.totalorder %s26, 0
      %p136 = por %p134, %p135
      %p137 = scmp.ne.s32.totalorder %s123, %s124
      %p138 = scmp.eq.s32.totalorder %s27, 1
      %p139 = por %p137, %p138
      %p141 = scmp.ne.s32.totalorder %s124, %s140
      %p142 = scmp.eq.s32.totalorder %s27, 0
      %p143 = por %p141, %p142
      %p144 = scmp.le.s32.totalorder 1, %s21
      %p145 = scmp.lt.s32.totalorder %s21, 3
      %p146 = pnand %p144, %p145
      %p147 = pneg %p146
      // Predicated region
      $region9: #{tpu_custom_call.1} parent=5 // pred_check
        _
      $region10: #{tpu_custom_call.1} parent=5 // pred_check_branch
        %149 = sbr.rel (%p146) target = $region12
      $region11: #{tpu_custom_call.1} parent=5 // pred_region
        %s150 = ssub.s32 %s21, 1
        // Predicated region
        $region13: #{tpu_custom_call.1} parent=11 // pred_check
          %p151 = pneg %p59
        $region14: #{tpu_custom_call.1} parent=11 // pred_check_branch
          %153 = sbr.rel (%p151) target = $region16
        $region15: #{tpu_custom_call.1} parent=11 // pred_region
          %s155 = ssub.s32 128, 128
          %156 = vsyncadd [#allocation7], %s155
          %s157 = smul.addr %s31, 128
          %s158 = scalar_lea.hbm %s2, %s157
          %s160 = sshll.u32 [#allocation6], 4
          %s161 = int_to_ptr.vmem [resolvable:$true] %s160
          %163 = dma.hbm_to_vmem [thread:$0]  %s158, 128, %s161, [#allocation7]
        $region16: #{tpu_custom_call.1} parent=11 // pred_fallthru
          _
        // Predicated region
        $region17: #{tpu_custom_call.1} parent=11 // pred_check
          %p164 = pneg %p108
        $region18: #{tpu_custom_call.1} parent=11 // pred_check_branch
          %166 = sbr.rel (%p164) target = $region20
        $region19: #{tpu_custom_call.1} parent=11 // pred_region
          _
        $region20: #{tpu_custom_call.1} parent=11 // pred_fallthru
          _
      $region12: #{tpu_custom_call.1} parent=5 // pred_fallthru
        _
      %p167 = scmp.lt.s32.totalorder %s21, 2
      // Predicated region
      $region21: #{tpu_custom_call.1} parent=5 // pred_check
        %p168 = pneg %p167
      $region22: #{tpu_custom_call.1} parent=5 // pred_check_branch
        %170 = sbr.rel (%p168) target = $region24
      $region23: #{tpu_custom_call.1} parent=5 // pred_region
        // Predicated region
        $region25: #{tpu_custom_call.1} parent=23 // pred_check
          %p171 = pneg %p81
        $region26: #{tpu_custom_call.1} parent=23 // pred_check_branch
          %173 = sbr.rel (%p171) target = $region28
        $region27: #{tpu_custom_call.1} parent=23 // pred_region
          %p174 = scmp.lt.s32.totalorder %s28, 1
          %s175 = scalar_select %p174, %s28, 1
          %p176 = scmp.lt.s32.totalorder %s29, 0
          %s177 = scalar_select %p176, %s29, 0
          %s178 = sadd.s32 %s177, %s175
          %s179 = smul.addr %s178, 8
          %s180 = scalar_lea.vmem %s3, %s179
        $region28: #{tpu_custom_call.1} parent=23 // pred_fallthru
          _
      $region24: #{tpu_custom_call.1} parent=5 // pred_fallthru
        _
      %p181 = scmp.le.s32.totalorder 1, %s21
      %p182 = scmp.lt.s32.totalorder %s21, 3
      %p183 = pnand %p181, %p182
      %p184 = pneg %p183
      // Predicated region
      $region29: #{tpu_custom_call.1} parent=5 // pred_check
        _
      $region30: #{tpu_custom_call.1} parent=5 // pred_check_branch
        %186 = sbr.rel (%p183) target = $region32
      $region31: #{tpu_custom_call.1} parent=5 // pred_region
        %s187 = ssub.s32 %s21, 1
        // Predicated region
        $region33: #{tpu_custom_call.1} parent=31 // pred_check
          %p188 = pneg %p59
        $region34: #{tpu_custom_call.1} parent=31 // pred_check_branch
          %190 = sbr.rel (%p188) target = $region36
        $region35: #{tpu_custom_call.1} parent=31 // pred_region
          %191 = dma.done [#allocation7], 128
        $region36: #{tpu_custom_call.1} parent=31 // pred_fallthru
          _
        %p192 = pneg %p59
        %p193 = pneg %p56
        %p194 = scmp.lt.s32.totalorder %s30, 1
        %s195 = scalar_select %p194, %s30, 1
        %p196 = scmp.lt.s32.totalorder %s31, 0
        %s197 = scalar_select %p196, %s31, 0
        %s198 = sadd.s32 %s197, %s195
        %s199 = smul.addr %s198, 8
        %s200 = scalar_lea.vmem %s3, %s199
        %p201 = pneg %p87
        %p202 = pneg %p84
        %p203 = pneg %p108
        %p204 = pneg %p105
        %p205 = pneg %p136
        %p206 = pneg %p133
        %s207 = sand.u32 %s123, 1
        %s208 = scalar_lea.sflag [#allocation8], %s207
        %s209 = sand.u32 %s123, 1
        %s210 = smul.addr %s209, 8
        %s211 = scalar_lea.vmem [#allocation9], %s210
        %p212 = scmp.lt.s32.totalorder %s30, 1
        %s213 = scalar_select %p212, %s30, 1
        %p214 = scmp.lt.s32.totalorder %s31, 0
        %s215 = scalar_select %p214, %s31, 0
        %s216 = sadd.s32 %s215, %s213
        %s217 = smul.addr %s216, 8
        %s218 = scalar_lea.vmem %s3, %s217
        %s219 = smul.u32 %s31, 8
        loop: start=0, step=1, limit=8
        $region37: #{tpu_custom_call.1} parent=31 // loop_pre_header
          _
        $region38: #{tpu_custom_call.1} parent=31 // loop_header
          %s221 = sphi 0, %s225
          %p222 = scmp.ge.s32.totalorder %s221, 8
        $region39: #{tpu_custom_call.1} parent=31 // loop_header_branch
          %224 = sbr.rel (%p222) target = $region43
        $region40: #{tpu_custom_call.1} parent=31 // loop_body
          %s226 = sadd.s32 %s219, %s221
          %s227 = sshra.s32 %s226, 7
          %s228 = sand.u32 %s226, 127
          %s229 = sadd.s32 %s227, %s30
          %s230 = smul.u32 %s229, 128
          %s231 = sshra.s32 %s226, 7
          %s232 = sand.u32 %s226, 127
          %s233 = sadd.s32 %s230, %s232
          %s234 = sld [smem:[#allocation5 + %s233]]
          %p235 = scmp.gt.s32.totalorder %s234, 0
          %s236 = scalar_select %p235, %s234, 0
          %p237 = scmp.lt.s32.totalorder %s236, 99
          %s238 = scalar_select %p237, %s236, 99
          %s239 = smul.addr %s238, 16
          %s240 = scalar_lea.hbm %s1, %s239
          %s241 = scalar_lea.vmem [#allocation2], %s221
          // Predicated region
          $region44: #{tpu_custom_call.1} parent=40 // pred_check
            _
          $region45: #{tpu_custom_call.1} parent=40 // pred_check_branch
            %243 = sbr.rel target = $region47
          $region46: #{tpu_custom_call.1} parent=40 // pred_region
            %244 = sst [smem:[#allocation12]] [#allocation11]
            %245 = sst [smem:[#allocation13]] [#allocation10]
          $region47: #{tpu_custom_call.1} parent=40 // pred_fallthru
            _
          %247 = shalt.err (0)
          %s249 = sshll.u32 %s241, 4
          %s250 = int_to_ptr.vmem [resolvable:$true] %s249
          %252 = dma.hbm_to_vmem [thread:$0]  %s240, 16, %s250, [#allocation3]
        $region41: #{tpu_custom_call.1} parent=31 // loop_footer
          %s225 = sadd.s32 1, %s221
        $region42: #{tpu_custom_call.1} parent=31 // loop_footer_branch
          %220 = sbr.rel target = $region38
        $region43: #{tpu_custom_call.1} parent=31 // loop_exit
          _
        loop: start=0, step=1, limit=8
        $region48: #{tpu_custom_call.1} parent=31 // loop_pre_header
          _
        $region49: #{tpu_custom_call.1} parent=31 // loop_header
          %s254 = sphi 0, %s258
          %p255 = scmp.ge.s32.totalorder %s254, 8
        $region50: #{tpu_custom_call.1} parent=31 // loop_header_branch
          %257 = sbr.rel (%p255) target = $region54
        $region51: #{tpu_custom_call.1} parent=31 // loop_body
          %s259 = smul.u32 1, 1
          %s260 = sshll.u32 %s259, 4
          %261 = dma.done [#allocation3], %s260
        $region52: #{tpu_custom_call.1} parent=31 // loop_footer
          %s258 = sadd.s32 1, %s254
        $region53: #{tpu_custom_call.1} parent=31 // loop_footer_branch
          %253 = sbr.rel target = $region49
        $region54: #{tpu_custom_call.1} parent=31 // loop_exit
          _
        %v262 = vld [vmem:[#allocation2] sm:$0xff]
        %v263 = vld [vmem:[#allocation6] sm:$0xff]
        %v264 = vadd.f32 %v262, %v263
        %v265 = vld [vmem:[%s218] sm:$0xff]
        %v266 = vld [vmem:[%s4] sm:$0x1]
        %vm267 = vcmp.eq.s32.totalorder %v265, 0
        %v268 = vsel %vm267, 1, 0
        %269 = vset.pattern.permute.xlu0 0
        %270 = vperm.xlu0 %269, %v268
        %v271 = vpop.permute.xlu0 %270
        %vm272 = vcmp.eq.s32.totalorder %v271, 1
        %v273 = vlaneseq
        %v274 = vshrl.u32 %v273, 7
        %v275 = vsub.s32 0, %v274
        %v276 = vrot.slane %v266, %v275
        %v277 = vsel %vm272, %v276, 0.0
        %v278 = vadd.f32 %v264, %v277
        %v279 = vld [vmem:[%s4 + $0x1] sm:$0x1]
        %vm280 = vcmp.eq.s32.totalorder %v265, 1
        %v281 = vsel %vm280, 1, 0
        %282 = vset.pattern.permute.xlu0 0
        %283 = vperm.xlu0 %282, %v281
        %v284 = vpop.permute.xlu0 %283
        %vm285 = vcmp.eq.s32.totalorder %v284, 1
        %v286 = vlaneseq
        %v287 = vshrl.u32 %v286, 7
        %v288 = vsub.s32 0, %v287
        %v289 = vrot.slane %v279, %v288
        %v290 = vsel %vm285, %v289, 0.0
        %v291 = vadd.f32 %v278, %v290
        %292 = vst [vmem:[%s211] sm:$0xff] %v291
        %s293 = sand.u32 %s123, 1
        %s294 = scalar_lea.sflag [#allocation8], %s293
        %s295 = sand.u32 %s123, 1
        %s296 = smul.addr %s295, 8
        %s297 = scalar_lea.vmem [#allocation9], %s296
        // Predicated region
        $region55: #{tpu_custom_call.1} parent=31 // pred_check
          %p298 = pneg %p133
        $region56: #{tpu_custom_call.1} parent=31 // pred_check_branch
          %300 = sbr.rel (%p298) target = $region58
        $region57: #{tpu_custom_call.1} parent=31 // pred_region
          %s302 = ssub.s32 128, 128
          %303 = vsyncadd %s294, %s302
          %s304 = sadd.s32 %s31, %s30
          %s305 = smul.addr %s304, 128
          %s306 = scalar_lea.hbm %s5, %s305
          %s308 = sshll.u32 %s297, 4
          %s309 = int_to_ptr.vmem [resolvable:$true] %s308
          %311 = dma.vmem_to_hbm [thread:$0]  %s309, 128, %s306, %s294
        $region58: #{tpu_custom_call.1} parent=31 // pred_fallthru
          _
      $region32: #{tpu_custom_call.1} parent=5 // pred_fallthru
        _
      %p312 = scmp.le.s32.totalorder 2, %s21
      // Predicated region
      $region59: #{tpu_custom_call.1} parent=5 // pred_check
        %p313 = pneg %p312
      $region60: #{tpu_custom_call.1} parent=5 // pred_check_branch
        %315 = sbr.rel (%p313) target = $region62
      $region61: #{tpu_custom_call.1} parent=5 // pred_region
        %s316 = ssub.s32 %s21, 2
        // Predicated region
        $region63: #{tpu_custom_call.1} parent=61 // pred_check
          %p317 = pneg %p139
        $region64: #{tpu_custom_call.1} parent=61 // pred_check_branch
          %319 = sbr.rel (%p317) target = $region66
        $region65: #{tpu_custom_call.1} parent=61 // pred_region
          %s320 = sand.u32 %s124, 1
          %s321 = scalar_lea.sflag [#allocation8], %s320
          %s322 = sand.u32 %s124, 1
          %s323 = smul.addr %s322, 8
          %s324 = scalar_lea.vmem [#allocation9], %s323
          %325 = dma.done %s321, 128
        $region66: #{tpu_custom_call.1} parent=61 // pred_fallthru
          _
      $region62: #{tpu_custom_call.1} parent=5 // pred_fallthru
        _
    $region6: #{tpu_custom_call.1} parent=1 // loop_footer
      %s25 = sadd.s32 1, %s21
    $region7: #{tpu_custom_call.1} parent=1 // loop_footer_branch
      %20 = sbr.rel target = $region3
    $region8: #{tpu_custom_call.1} parent=1 // loop_exit
      _
    %326 = vsyncpa [#allocation7], 1
    %s327 = scalar_lea.sflag [#allocation7], 1
    %328 = vsyncpa %s327, 1
    %329 = vsyncpa [#allocation8], 1
    %s330 = scalar_lea.sflag [#allocation8], 1
    %331 = vsyncpa %s330, 1
  %332 = vsyncmov [#allocation3]
  %s333 = vpop.sfrf %332
  %p334 = scmp.eq.s32.totalorder %s333, 0
  %p335 = pneg %p334
  %337 = shalt.err (%p335)

</llo_original>
